<compile_context>
chip_gen: v7x
topology: tpu7x:2x2x1
jax: 0.10.0
libtpu: 0.0.40
codegen_flags: <defaults>
</compile_context>

<pallas_src>
import jax
import jax.numpy as jnp
from jax.experimental import pallas as pl
from jax.experimental.pallas import tpu as pltpu


def _round_up(x: int, m: int) -> int:
    return ((x + m - 1) // m) * m


def _mean_pool_kernel(len_ref, x_ref, o_ref, acc_ref):
    # len_ref : VMEM int32[RB, 1]      per-row valid lengths (already clamped to T)
    # x_ref   : VMEM [RB, tT, Hp]      one (row-block, T-tile) slab of features
    # o_ref   : VMEM [RB, Hp]          pooled output (resident across the T axis)
    # acc_ref : VMEM f32[RB, Hp]       running masked sum
    t = pl.program_id(1)
    nt = pl.num_programs(1)

    @pl.when(t == 0)
    def _init():
        acc_ref[...] = jnp.zeros_like(acc_ref)

    rb, t_tile, _ = x_ref.shape
    t0 = t * t_tile

    # Valid-frame mask for this T tile: mask[r, k] = 1.0 iff (t0 + k) < len[r]
    t_idx = jax.lax.broadcasted_iota(jnp.int32, (rb, t_tile), 1) + t0   # (RB, tT)
    mask = (t_idx < len_ref[...]).astype(jnp.float32)                   # (RB, tT)

    x = x_ref[...].astype(jnp.float32)                                  # (RB, tT, Hp)
    acc_ref[...] += jnp.sum(x * jnp.expand_dims(mask, -1), axis=1)      # (RB, Hp)

    @pl.when(t == nt - 1)
    def _finalize():
        # Exact reciprocal on an (RB, 1) vector, then one broadcast multiply
        # over the lane-dense (RB, Hp) slab.  length==0 -> inf -> 0*inf = NaN,
        # matching torch.mean over an empty slice.
        inv = 1.0 / len_ref[...].astype(jnp.float32)                    # (RB, 1)
        o_ref[...] = (acc_ref[...] * inv).astype(o_ref.dtype)


def mean_pooling(feature_BxTxH: jax.Array, features_len: jax.Array,
                 *, row_block: int = 8, t_tile: int | None = None) -> jax.Array:
    """Masked mean pooling over the time axis.

    feature_BxTxH : [B, T, H] (float32 or bf16)
    features_len  : [B] int   per-example valid lengths
    returns       : [B, H]    same dtype as the features
    """
    B, T, H = feature_BxTxH.shape
    dtype = feature_BxTxH.dtype
    dtype_bytes = jnp.dtype(dtype).itemsize

    # Clamp lengths to T (PyTorch slicing x[:L] never reads past T).
    lens = jnp.minimum(features_len.astype(jnp.int32), T)

    # Lane-dense hidden dim (multiple of 128) -> unmasked vst output stores.
    Hp = _round_up(H, 128)

    # Sublane multiple depends on packing (f32: 8, bf16: 16, int8/fp8: 32).
    sub = {4: 8, 2: 16, 1: 32}.get(dtype_bytes, 8)

    # Pick a T tile so one input block is ~4 MiB (double-buffered ~8 MiB):
    # bounded VMEM on v7x (64 MiB physical) yet big enough to amortize the
    # ~0.35 us per-step overhead on all generations.
    if t_tile is None:
        budget_bytes = 4 * 1024 * 1024
        cap = (budget_bytes // (row_block * Hp * dtype_bytes)) // sub * sub
        t_tile = max(sub, min(_round_up(T, sub), max(cap, sub)))

    Bp = _round_up(B, row_block)
    Tp = _round_up(T, t_tile)

    x = feature_BxTxH
    if (Bp, Tp, Hp) != (B, T, H):
        x = jnp.pad(x, ((0, Bp - B), (0, Tp - T), (0, Hp - H)))
    lens2d = jnp.pad(lens, (0, Bp - B), constant_values=1).reshape(Bp, 1)

    grid = (Bp // row_block, Tp // t_tile)

    out = pl.pallas_call(
        _mean_pool_kernel,
        out_shape=jax.ShapeDtypeStruct((Bp, Hp), dtype),
        grid=grid,
        in_specs=[
            pl.BlockSpec((row_block, 1), lambda b, t: (b, 0)),            # lengths
            pl.BlockSpec((row_block, t_tile, Hp), lambda b, t: (b, t, 0)),  # features
        ],
        out_specs=pl.BlockSpec((row_block, Hp), lambda b, t: (b, 0)),
        scratch_shapes=[pltpu.VMEM((row_block, Hp), jnp.float32)],
        compiler_params=pltpu.CompilerParams(
            dimension_semantics=("parallel", "arbitrary"),
            vmem_limit_bytes=32 * 1024 * 1024,
        ),
    )(lens2d, x)

    return out[:B, :H]


if __name__ == "__main__":
    key = jax.random.PRNGKey(0)
    B, T, H = 2, 8, 32

    k1, _ = jax.random.split(key)
    feature = jax.random.normal(k1, (B, T, H), dtype=jnp.float32)
    lengths = jnp.array([5, 8], dtype=jnp.int32)   # per-example valid lengths

    out = jax.block_until_ready(mean_pooling(feature, lengths))

    # Pure-JAX reference (mirrors the PyTorch loop semantics).
    ref = jnp.stack(
        [jnp.mean(feature[i, : int(lengths[i])], axis=0) for i in range(B)]
    )
    assert out.shape == (B, H)
    assert jnp.allclose(out, ref, atol=1e-5, rtol=1e-5)

    print("KERNEL_OK")
</pallas_src>

<mosaic_0001>
module attributes {stable_mosaic.version = 11 : i64} {
  func.func @_mean_pool_kernel(%arg0: i32, %arg1: i32, %arg2: memref<8x1xi32, #tpu.memory_space<vmem>>, %arg3: memref<8x8x128xf32, #tpu.memory_space<vmem>>, %arg4: memref<8x128xf32, #tpu.memory_space<vmem>>, %arg5: memref<8x128xf32, #tpu.memory_space<vmem>>) attributes {dimension_semantics = [#tpu.dimension_semantics<parallel>, #tpu.dimension_semantics<arbitrary>], iteration_bounds = array<i64: 1, 1>, scalar_prefetch = 0 : i64, scratch_operands = 1 : i64, tpu.core_type = #tpu.core_type<tc>, window_params = [{transform_indices = @transform_0, window_bounds = array<i64: 8, 1>}, {transform_indices = @transform_1, window_bounds = array<i64: 8, 8, 128>}, {transform_indices = @transform_2, window_bounds = array<i64: 8, 128>}]} {
    %c0_i32 = arith.constant 0 : i32
    %0 = arith.cmpi eq, %arg1, %c0_i32 : i32
    %1 = arith.extui %0 : i1 to i32
    %c0_i32_0 = arith.constant 0 : i32
    %2 = arith.cmpi ne, %1, %c0_i32_0 : i32
    scf.if %2 {
      %cst_11 = arith.constant 0.000000e+00 : f32
      %23 = vector.broadcast %cst_11 : f32 to vector<8x128xf32>
      %c0_12 = arith.constant 0 : index
      %c0_13 = arith.constant 0 : index
      %24 = vector.load %arg5[%c0_12, %c0_13] : memref<8x128xf32, #tpu.memory_space<vmem>>, vector<8x128xf32>
      tpu.vector_store %arg5[%c0_12, %c0_13], %23 {strides = array<i32>} : memref<8x128xf32, #tpu.memory_space<vmem>>, vector<8x128xf32>,
    } else {
    }
    %c8_i32 = arith.constant 8 : i32
    %3 = arith.muli %arg1, %c8_i32 : i32
    %4 = tpu.iota {dimensions = array<i32: 1>} : vector<8x8xi32>
    %5 = vector.broadcast %3 : i32 to vector<8x8xi32>
    %6 = arith.addi %4, %5 : vector<8x8xi32>
    %c0 = arith.constant 0 : index
    %c0_1 = arith.constant 0 : index
    %7 = vector.load %arg2[%c0, %c0_1] : memref<8x1xi32, #tpu.memory_space<vmem>>, vector<8x1xi32>
    %8 = vector.broadcast %7 : vector<8x1xi32> to vector<8x8xi32>
    %9 = arith.cmpi slt, %6, %8 : vector<8x8xi32>
    %10 = arith.extui %9 : vector<8x8xi1> to vector<8x8xi32>
    %11 = arith.sitofp %10 : vector<8x8xi32> to vector<8x8xf32>
    %c0_2 = arith.constant 0 : index
    %c0_3 = arith.constant 0 : index
    %c0_4 = arith.constant 0 : index
    %12 = vector.load %arg3[%c0_2, %c0_3, %c0_4] : memref<8x8x128xf32, #tpu.memory_space<vmem>>, vector<8x8x128xf32>
    %c0_5 = arith.constant 0 : index
    %c0_6 = arith.constant 0 : index
    %13 = vector.load %arg5[%c0_5, %c0_6] : memref<8x128xf32, #tpu.memory_space<vmem>>, vector<8x128xf32>
    %14 = vector.shape_cast %11 : vector<8x8xf32> to vector<8x8x1xf32>
    %15 = vector.broadcast %14 : vector<8x8x1xf32> to vector<8x8x128xf32>
    %16 = arith.mulf %12, %15 : vector<8x8x128xf32>
    %cst = arith.constant dense<0.000000e+00> : vector<8x128xf32>
    %17 = vector.multi_reduction <add>, %16, %cst [1] : vector<8x8x128xf32> to vector<8x128xf32>
    %18 = arith.addf %13, %17 : vector<8x128xf32>
    %c0_7 = arith.constant 0 : index
    %c0_8 = arith.constant 0 : index
    %19 = vector.load %arg5[%c0_7, %c0_8] : memref<8x128xf32, #tpu.memory_space<vmem>>, vector<8x128xf32>
    tpu.vector_store %arg5[%c0_7, %c0_8], %18 {strides = array<i32>} : memref<8x128xf32, #tpu.memory_space<vmem>>, vector<8x128xf32>,
    %c0_i32_9 = arith.constant 0 : i32
    %20 = arith.cmpi eq, %arg1, %c0_i32_9 : i32
    %21 = arith.extui %20 : i1 to i32
    %c0_i32_10 = arith.constant 0 : i32
    %22 = arith.cmpi ne, %21, %c0_i32_10 : i32
    scf.if %22 {
      %c0_11 = arith.constant 0 : index
      %c0_12 = arith.constant 0 : index
      %23 = vector.load %arg2[%c0_11, %c0_12] : memref<8x1xi32, #tpu.memory_space<vmem>>, vector<8x1xi32>
      %24 = arith.sitofp %23 : vector<8x1xi32> to vector<8x1xf32>
      %cst_13 = arith.constant 1.000000e+00 : f32
      %25 = vector.broadcast %cst_13 : f32 to vector<8x1xf32>
      %26 = arith.divf %25, %24 : vector<8x1xf32>
      %c0_14 = arith.constant 0 : index
      %c0_15 = arith.constant 0 : index
      %27 = vector.load %arg5[%c0_14, %c0_15] : memref<8x128xf32, #tpu.memory_space<vmem>>, vector<8x128xf32>
      %28 = vector.broadcast %26 : vector<8x1xf32> to vector<8x128xf32>
      %29 = arith.mulf %27, %28 : vector<8x128xf32>
      %c0_16 = arith.constant 0 : index
      %c0_17 = arith.constant 0 : index
      %30 = vector.load %arg4[%c0_16, %c0_17] : memref<8x128xf32, #tpu.memory_space<vmem>>, vector<8x128xf32>
      tpu.vector_store %arg4[%c0_16, %c0_17], %29 {strides = array<i32>} : memref<8x128xf32, #tpu.memory_space<vmem>>, vector<8x128xf32>,
    } else {
    }
    return
  }
  func.func @transform_0(%arg0: i32, %arg1: i32) -> (i32, i32) {
    %c0_i32 = arith.constant 0 : i32
    %c0_i32_0 = arith.constant 0 : i32
    return %arg0, %c0_i32 : i32, i32
  }
  func.func @transform_1(%arg0: i32, %arg1: i32) -> (i32, i32, i32) {
    %c0_i32 = arith.constant 0 : i32
    %c0_i32_0 = arith.constant 0 : i32
    return %arg0, %arg1, %c0_i32 : i32, i32, i32
  }
  func.func @transform_2(%arg0: i32, %arg1: i32) -> (i32, i32) {
    %c0_i32 = arith.constant 0 : i32
    %c0_i32_0 = arith.constant 0 : i32
    return %arg0, %c0_i32 : i32, i32
  }
}

</mosaic_0001>

<llo_original>
// kernel: tpu_custom_call.1
$region0: #{tpu_custom_call.1}
  #allocation0 [shape = 'u32[]', space=smem, size = 0x4, offset = 0x4, fixed_abs, tag = 'smem constant byte address 0x4 - core index']
  #allocation1 [shape = 'u32[144,128]{1,0:T(1,128)}', space=vmem, size = 0x12000, scoped, tag = 'internal scratch']
  #allocation2 [shape = 'f32[8,128]{1,0:T(8,128)}', space=vmem, size = 0x1000, scoped, tag = 'scratch operand']
  %s0 = inlined_call_operand.vmem [shape: s32[8,1], index: 0, kind: input, shape index: {}]
  %s1 = inlined_call_operand.hbm [shape: f32[8,8,128], index: 1, kind: input, shape index: {}]
  %s2 = inlined_call_operand.hbm [shape: f32[8,128], index: 2, kind: output, shape index: {}]
  %s3 = sld [smem:[#allocation0]]
  $region30: #{tpu_custom_call.1} parent=0
    _
  %s5 = ssub.s32 1, %s3
  %s6 = scalar_select 0, %s5, %s3
  $region1: #{tpu_custom_call.1} parent=0
    #allocation3 [shape = 'u8[32768]{0}', space=vmem, size = 0x8000, scoped, tag = 'input window, operand 1, single buffered']
    #allocation4 [shape = 's32[1]{0}', space=sflag, size = 0x4, scoped, tag = 'scoped memory for tpu_custom_call.1']
    #allocation5 [shape = 's32[1]{0}', space=sflag, size = 0x4, scoped, tag = 'scoped memory for tpu_custom_call.1']
    #allocation6 [shape = 'u8[4096]{0}', space=vmem, size = 0x1000, scoped, tag = 'output window, operand 0, single buffered']
    %7 = vsyncpa [#allocation4], 0
    %8 = vsyncpa [#allocation5], 0
    // Predicated region
    $region2: #{tpu_custom_call.1} parent=1 // pred_check
      _
    $region3: #{tpu_custom_call.1} parent=1 // pred_check_branch
      %10 = sbr.rel (0) target = $region5
    $region4: #{tpu_custom_call.1} parent=1 // pred_region
      _
    $region5: #{tpu_custom_call.1} parent=1 // pred_fallthru
      _
    // Predicated region
    $region6: #{tpu_custom_call.1} parent=1 // pred_check
      _
    $region7: #{tpu_custom_call.1} parent=1 // pred_check_branch
      %12 = sbr.rel (0) target = $region9
    $region8: #{tpu_custom_call.1} parent=1 // pred_region
      %s14 = ssub.s32 1024, 1024
      %15 = vsyncadd [#allocation4], %s14
      %s16 = sshll.u32 [#allocation3], 4
      %s17 = int_to_ptr.vmem [resolvable:$true] %s16
      %22 = dma.hbm_to_vmem [thread:$0]  %s1, 1024, %s17, [#allocation4], 128, 128, 8
    $region9: #{tpu_custom_call.1} parent=1 // pred_fallthru
      _
    // Predicated region
    $region10: #{tpu_custom_call.1} parent=1 // pred_check
      _
    $region11: #{tpu_custom_call.1} parent=1 // pred_check_branch
      %24 = sbr.rel (0) target = $region13
    $region12: #{tpu_custom_call.1} parent=1 // pred_region
      %25 = dma.done [#allocation4], 1024
    $region13: #{tpu_custom_call.1} parent=1 // pred_fallthru
      _
    %p26 = scmp.eq.s32.totalorder 0, 0
    // Predicated region
    $region14: #{tpu_custom_call.1} parent=1 // pred_check
      %p27 = pneg %p26
    $region15: #{tpu_custom_call.1} parent=1 // pred_check_branch
      %29 = sbr.rel (%p27) target = $region17
    $region16: #{tpu_custom_call.1} parent=1 // pred_region
      %30 = vst [vmem:[#allocation2] sm:$0xff] 0.0
    $region17: #{tpu_custom_call.1} parent=1 // pred_fallthru
      _
    %s31 = smul.u32 0, 8
    %v32 = vlaneseq
    %v33 = vand.u32 %v32, 127
    %v34 = vstv %s31
    %v35 = vadd.s32 %v33, %v34
    %v36 = vld [vmem:[%s0] sm:$0xff]
    %37 = vset.pattern.permute.xlu0 0
    %38 = vperm.xlu0 %37, %v36
    %v39 = vpop.permute.xlu0 %38
    %vm40 = vcmp.lt.s32.totalorder %v35, %v39
    %v41 = vsel %vm40, 1, 0
    %v42 = vcvt.s32.f32 %v41
    %v43 = vld [vmem:[#allocation3] sm:$0xff]
    %v44 = vld [vmem:[#allocation3 + $0x8] sm:$0xff]
    %v45 = vld [vmem:[#allocation3 + $0x10] sm:$0xff]
    %v46 = vld [vmem:[#allocation3 + $0x18] sm:$0xff]
    %v47 = vld [vmem:[#allocation3 + $0x20] sm:$0xff]
    %v48 = vld [vmem:[#allocation3 + $0x28] sm:$0xff]
    %v49 = vld [vmem:[#allocation3 + $0x30] sm:$0xff]
    %v50 = vld [vmem:[#allocation3 + $0x38] sm:$0xff]
    %v51 = vld [vmem:[#allocation2] sm:$0xff]
    %v52 = vlaneseq
    %v53 = vshrl.u32 %v52, 7
    %v54 = vsub.s32 0, %v53
    %v55 = vrot.slane %v42, %v54
    %57 = vbcast.lane.b32.xlu0 %v55, 256
    %v58 = vpop.permute.xlu0 %57
    %v59 = vlaneseq
    %v60 = vshrl.u32 %v59, 7
    %v61 = vsub.s32 1, %v60
    %v62 = vrot.slane %v42, %v61
    %64 = vbcast.lane.b32.xlu0 %v62, 256
    %v65 = vpop.permute.xlu0 %64
    %v66 = vlaneseq
    %v67 = vshrl.u32 %v66, 7
    %v68 = vsub.s32 2, %v67
    %v69 = vrot.slane %v42, %v68
    %71 = vbcast.lane.b32.xlu0 %v69, 256
    %v72 = vpop.permute.xlu0 %71
    %v73 = vlaneseq
    %v74 = vshrl.u32 %v73, 7
    %v75 = vsub.s32 3, %v74
    %v76 = vrot.slane %v42, %v75
    %78 = vbcast.lane.b32.xlu0 %v76, 256
    %v79 = vpop.permute.xlu0 %78
    %v80 = vlaneseq
    %v81 = vshrl.u32 %v80, 7
    %v82 = vsub.s32 4, %v81
    %v83 = vrot.slane %v42, %v82
    %85 = vbcast.lane.b32.xlu0 %v83, 256
    %v86 = vpop.permute.xlu0 %85
    %v87 = vlaneseq
    %v88 = vshrl.u32 %v87, 7
    %v89 = vsub.s32 5, %v88
    %v90 = vrot.slane %v42, %v89
    %92 = vbcast.lane.b32.xlu0 %v90, 256
    %v93 = vpop.permute.xlu0 %92
    %v94 = vlaneseq
    %v95 = vshrl.u32 %v94, 7
    %v96 = vsub.s32 6, %v95
    %v97 = vrot.slane %v42, %v96
    %99 = vbcast.lane.b32.xlu0 %v97, 256
    %v100 = vpop.permute.xlu0 %99
    %v101 = vlaneseq
    %v102 = vshrl.u32 %v101, 7
    %v103 = vsub.s32 7, %v102
    %v104 = vrot.slane %v42, %v103
    %106 = vbcast.lane.b32.xlu0 %v104, 256
    %v107 = vpop.permute.xlu0 %106
    %v108 = vmul.f32 %v43, %v58
    %v109 = vmul.f32 %v44, %v65
    %v110 = vmul.f32 %v45, %v72
    %v111 = vmul.f32 %v46, %v79
    %v112 = vmul.f32 %v47, %v86
    %v113 = vmul.f32 %v48, %v93
    %v114 = vmul.f32 %v49, %v100
    %v115 = vmul.f32 %v50, %v107
    %v116 = vrot.slane %v108, 4
    %v117 = vadd.f32 %v108, %v116
    %v118 = vrot.slane %v117, 2
    %v119 = vadd.f32 %v117, %v118
    %v120 = vrot.slane %v119, 1
    %v121 = vadd.f32 %v119, %v120
    %v122 = vrot.slane %v109, 4
    %v123 = vadd.f32 %v109, %v122
    %v124 = vrot.slane %v123, 2
    %v125 = vadd.f32 %v123, %v124
    %v126 = vrot.slane %v125, 1
    %v127 = vadd.f32 %v125, %v126
    %v128 = vrot.slane %v110, 4
    %v129 = vadd.f32 %v110, %v128
    %v130 = vrot.slane %v129, 2
    %v131 = vadd.f32 %v129, %v130
    %v132 = vrot.slane %v131, 1
    %v133 = vadd.f32 %v131, %v132
    %v134 = vrot.slane %v111, 4
    %v135 = vadd.f32 %v111, %v134
    %v136 = vrot.slane %v135, 2
    %v137 = vadd.f32 %v135, %v136
    %v138 = vrot.slane %v137, 1
    %v139 = vadd.f32 %v137, %v138
    %v140 = vrot.slane %v112, 4
    %v141 = vadd.f32 %v112, %v140
    %v142 = vrot.slane %v141, 2
    %v143 = vadd.f32 %v141, %v142
    %v144 = vrot.slane %v143, 1
    %v145 = vadd.f32 %v143, %v144
    %v146 = vrot.slane %v113, 4
    %v147 = vadd.f32 %v113, %v146
    %v148 = vrot.slane %v147, 2
    %v149 = vadd.f32 %v147, %v148
    %v150 = vrot.slane %v149, 1
    %v151 = vadd.f32 %v149, %v150
    %v152 = vrot.slane %v114, 4
    %v153 = vadd.f32 %v114, %v152
    %v154 = vrot.slane %v153, 2
    %v155 = vadd.f32 %v153, %v154
    %v156 = vrot.slane %v155, 1
    %v157 = vadd.f32 %v155, %v156
    %v158 = vrot.slane %v115, 4
    %v159 = vadd.f32 %v115, %v158
    %v160 = vrot.slane %v159, 2
    %v161 = vadd.f32 %v159, %v160
    %v162 = vrot.slane %v161, 1
    %v163 = vadd.f32 %v161, %v162
    %vm172 = vcmask 1041409
    %v173 = vsel %vm172, %v127, %v121
    %vm174 = vcmask 1042434
    %v175 = vsel %vm174, %v133, %v173
    %vm176 = vcmask 1043459
    %v177 = vsel %vm176, %v139, %v175
    %vm178 = vcmask 1044484
    %v179 = vsel %vm178, %v145, %v177
    %vm180 = vcmask 1045509
    %v181 = vsel %vm180, %v151, %v179
    %vm182 = vcmask 1046534
    %v183 = vsel %vm182, %v157, %v181
    %vm184 = vcmask 1047559
    %v185 = vsel %vm184, %v163, %v183
    %v187 = vadd.f32 %v51, %v185
    %188 = vst [vmem:[#allocation2] sm:$0xff] %v187
    // Predicated region
    $region18: #{tpu_custom_call.1} parent=1 // pred_check
      %p189 = pneg %p26
    $region19: #{tpu_custom_call.1} parent=1 // pred_check_branch
      %191 = sbr.rel (%p189) target = $region21
    $region20: #{tpu_custom_call.1} parent=1 // pred_region
      %v192 = vld [vmem:[%s0] sm:$0xff]
      %v193 = vcvt.s32.f32 %v192
      %v194 = vrcp.pop %v193
      %v195 = vmul.f32 1.0, %v194
      %v196 = vld [vmem:[#allocation2] sm:$0xff]
      %198 = vset.pattern.permute.xlu0 0
      %199 = vperm.xlu0 %198, %v195
      %v200 = vpop.permute.xlu0 %199
      %v202 = vmul.f32 %v196, %v200
      %203 = vst [vmem:[#allocation6] sm:$0xff] %v202
    $region21: #{tpu_custom_call.1} parent=1 // pred_fallthru
      _
    // Predicated region
    $region22: #{tpu_custom_call.1} parent=1 // pred_check
      _
    $region23: #{tpu_custom_call.1} parent=1 // pred_check_branch
      %205 = sbr.rel (0) target = $region25
    $region24: #{tpu_custom_call.1} parent=1 // pred_region
      %s207 = ssub.s32 128, 128
      %208 = vsyncadd [#allocation5], %s207
      %s210 = sshll.u32 [#allocation6], 4
      %s211 = int_to_ptr.vmem [resolvable:$true] %s210
      %213 = dma.vmem_to_hbm [thread:$0]  %s211, 128, %s2, [#allocation5]
    $region25: #{tpu_custom_call.1} parent=1 // pred_fallthru
      _
    // Predicated region
    $region26: #{tpu_custom_call.1} parent=1 // pred_check
      _
    $region27: #{tpu_custom_call.1} parent=1 // pred_check_branch
      %215 = sbr.rel (0) target = $region29
    $region28: #{tpu_custom_call.1} parent=1 // pred_region
      %216 = dma.done [#allocation5], 128
    $region29: #{tpu_custom_call.1} parent=1 // pred_fallthru
      _
    %217 = vsyncpa [#allocation4], 1
    %218 = vsyncpa [#allocation5], 1

</llo_original>
